<compile_context>
chip_gen: v5e
topology: v5e:2x2
jax: 0.10.0
libtpu: 0.0.40
codegen_flags: <defaults>
</compile_context>

<pallas_src>
import math

import jax
import jax.numpy as jnp
from jax.experimental import pallas as pl
from jax.experimental.pallas import tpu as pltpu

MAX_LEN = 2056.0   # max_len for index embeddings
MAX_POS = 2056.0   # max_positions for time embeddings


# ----------------------------------------------------------------------------
# Sinusoidal embedding helpers (pure JAX). Used only for the tiny wrapper
# precompute and for the validation reference; they mirror the PyTorch
# helpers get_index_embedding / get_time_embedding exactly.
# ----------------------------------------------------------------------------
def _index_embedding(indices, embed_size, max_len=MAX_LEN):
    k = jnp.arange(embed_size // 2, dtype=jnp.float32)
    denom = max_len ** (2.0 * k / embed_size)
    ang = indices[..., None] * jnp.pi / denom
    return jnp.concatenate([jnp.sin(ang), jnp.cos(ang)], axis=-1)


def _time_embedding(timesteps, embed_dim, max_positions=MAX_POS):
    ts = timesteps.astype(jnp.float32) * max_positions
    half = embed_dim // 2
    w = jnp.exp(jnp.arange(half, dtype=jnp.float32)
                * -(math.log(max_positions) / (half - 1)))
    ang = ts[:, None] * w[None, :]
    return jnp.concatenate([jnp.sin(ang), jnp.cos(ang)], axis=-1)


# ----------------------------------------------------------------------------
# Pallas kernel: one (batch, residue-tile) per grid step, both axes parallel.
# Pure VPU assembly of the output tile; the only MXU use is the cheap lane
# expansion of the two mask columns.
# ----------------------------------------------------------------------------
def _node_embedder_kernel(mask_ref, fm_ref, p_ref, rows_ref, const_ref, e_ref,
                          out_ref):
    # mask_ref/fm_ref : (1, tg, R)    binary residue / fixed masks (R packed)
    # p_ref           : (tg, R*c_s)   batch-invariant positional contribution
    # rows_ref        : (1, 2, R*c_s) per-batch rows [V1; V2] (lane-tiled)
    # const_ref       : (2, R*c_s)    constant rows  [V3; C ] (lane-tiled)
    # e_ref           : (R, R*c_s)    block lane-expansion matrix
    e = e_ref[...]
    # Lane-expand (tg, R) -> (tg, R*c_s) once on the idle MXU, reuse below.
    m = jnp.dot(mask_ref[0], e, preferred_element_type=jnp.float32)
    f = jnp.dot(fm_ref[0], e, preferred_element_type=jnp.float32)

    rows = rows_ref[0]            # (2, W)
    v1 = rows[0:1]                # Rt_b + (B1 - B0)   (per batch)
    v2 = rows[1:2]                # Rm - Rt_b          (per batch)
    cr = const_ref[...]
    v3 = cr[0:1]                  # A1 - A0
    c0 = cr[1:2]                  # A0 + B0 + bias

    # out = m * (P + V1 + f*V2) + f*V3 + C   -> lane-dense full-width store
    out_ref[0] = m * (p_ref[...] + v1 + f * v2) + f * v3 + c0


# ----------------------------------------------------------------------------
# Wrapper: tiny precompute + pallas_call.
# ----------------------------------------------------------------------------
def node_embedder_forward(timesteps, mask, fixed_mask, ss, params, cfg):
    """Pallas implementation of NodeEmbedder_v3.forward (mode='base_ss').

    mask / fixed_mask must be {0,1} indicator tensors (as in the reference
    usage): the index-embedding-of-mask terms are strength-reduced to a
    two-row table, which is exact only for binary values.
    """
    del ss  # SS_embed(ss) is computed by the reference forward but never used.

    b, n = mask.shape
    c_pos = cfg["c_pos_emb"]
    c_t = cfg["c_timestep_emb"]
    c_fm = cfg["c_fixedmask_emb"]
    c_s = cfg["c_s"]
    assert cfg["c_SS_emb"] == c_fm, (
        "base_ss Linear layout assumes c_SS_emb == c_fixedmask_emb")

    w = params["W"].astype(jnp.float32)
    bias = params["b"].astype(jnp.float32)
    assert w.shape == (c_pos + c_t + 2 * c_fm, c_s)
    w_pos = w[:c_pos]
    w_time = w[c_pos:c_pos + c_t]
    w_fm = w[c_pos + c_t:c_pos + c_t + c_fm]
    w_mask = w[c_pos + c_t + c_fm:c_pos + c_t + 2 * c_fm]

    # ---- tiny batch-invariant / per-batch-row precompute --------------------
    # Positional contribution (mask applied inside the kernel):
    pos = jnp.arange(n, dtype=jnp.float32)
    p_full = _index_embedding(pos, c_pos) @ w_pos                    # (N, c_s)

    # Time rows: one per batch (diffusion t) plus the motif row (t = 1).
    t = timesteps[:, 0].astype(jnp.float32)
    rt = _time_embedding(t, c_t) @ w_time                            # (B, c_s)
    rm = _time_embedding(jnp.ones((1,), jnp.float32), c_t) @ w_time  # (1, c_s)

    # Index embedding of a binary value only ever takes two row values.
    row01 = _index_embedding(jnp.array([0.0, 1.0], jnp.float32), c_fm)
    a_rows = row01 @ w_fm                                            # (2, c_s)
    b_rows = row01 @ w_mask                                          # (2, c_s)
    v3 = a_rows[1] - a_rows[0]                                       # (c_s,)
    db = b_rows[1] - b_rows[0]                                       # (c_s,)
    c_const = a_rows[0] + b_rows[0] + bias                           # (c_s,)

    v1 = rt + db[None, :]                                            # (B, c_s)
    v2 = rm - rt                                                     # (B, c_s)

    # ---- lane packing: make the output's last dim a multiple of 128 ---------
    if c_s <= 128 and 128 % c_s == 0 and n % (128 // c_s) == 0:
        r = 128 // c_s
    else:
        r = 1                      # already lane-dense / not evenly packable
    g = n // r
    wl = r * c_s

    # ---- residue-axis tile: keep VMEM buffers bounded, stay (8,128)-aligned -
    if g % 8 == 0:
        tg = 8
        for cand in (512, 256, 128, 64, 32, 16, 8):
            if g % cand == 0:
                tg = cand
                break
    else:
        tg = g                     # small / odd lengths: whole axis in one tile
    gt = g // tg

    mask_blk = mask.astype(jnp.float32).reshape(b, g, r)
    fm_blk = fixed_mask.astype(jnp.float32).reshape(b, g, r)
    p_packed = p_full.reshape(g, wl)
    rows_b = jnp.stack([jnp.tile(v1, (1, r)), jnp.tile(v2, (1, r))], axis=1)
    const_rows = jnp.stack([jnp.tile(v3, r), jnp.tile(c_const, r)], axis=0)
    expand = (jnp.arange(wl, dtype=jnp.int32)[None, :] // c_s
              == jnp.arange(r, dtype=jnp.int32)[:, None]).astype(jnp.float32)

    out_packed = pl.pallas_call(
        _node_embedder_kernel,
        out_shape=jax.ShapeDtypeStruct((b, g, wl), jnp.float32),
        grid=(b, gt),
        in_specs=[
            pl.BlockSpec((1, tg, r), lambda i, j: (i, j, 0)),   # mask blocks
            pl.BlockSpec((1, tg, r), lambda i, j: (i, j, 0)),   # fixed_mask
            pl.BlockSpec((tg, wl), lambda i, j: (j, 0)),        # positional
            pl.BlockSpec((1, 2, wl), lambda i, j: (i, 0, 0)),   # per-batch rows
            pl.BlockSpec((2, wl), lambda i, j: (0, 0)),         # constant rows
            pl.BlockSpec((r, wl), lambda i, j: (0, 0)),         # lane-expansion
        ],
        out_specs=pl.BlockSpec((1, tg, wl), lambda i, j: (i, j, 0)),
        compiler_params=pltpu.CompilerParams(
            dimension_semantics=("parallel", "parallel")),
    )(mask_blk, fm_blk, p_packed, rows_b, const_rows, expand)

    return out_packed.reshape(b, n, c_s)


# ----------------------------------------------------------------------------
# Pure-JAX reference (mirrors the PyTorch forward) for validation.
# ----------------------------------------------------------------------------
def node_embedder_reference(timesteps, mask, fixed_mask, ss, params, cfg):
    b, n = mask.shape
    pos = jnp.arange(n, dtype=jnp.float32)[None]
    pos_emb = _index_embedding(pos, cfg["c_pos_emb"])
    pos_emb = jnp.tile(pos_emb, (b, 1, 1)) * mask[..., None]

    def embed_t(ts):
        te = _time_embedding(ts[:, 0], cfg["c_timestep_emb"])[:, None, :]
        return jnp.repeat(te, n, axis=1) * mask[..., None]

    time_embed = embed_t(timesteps)
    motif_time_embed = embed_t(jnp.ones_like(timesteps))
    time_embed = (time_embed * (1.0 - fixed_mask[..., None])
                  + motif_time_embed * fixed_mask[..., None])

    fm_emb = _index_embedding(fixed_mask, cfg["c_fixedmask_emb"])
    mask_emb = _index_embedding(mask, cfg["c_fixedmask_emb"])

    feats = jnp.concatenate([pos_emb, time_embed, fm_emb, mask_emb], axis=-1)
    return feats @ params["W"] + params["b"]


# ----------------------------------------------------------------------------
if __name__ == "__main__":
    # module config (c_SS_emb == c_fixedmask_emb, as the base_ss Linear requires)
    cfg = dict(c_s=32, c_pos_emb=16, c_timestep_emb=16,
               c_fixedmask_emb=8, c_SS_emb=8)
    B, N = 2, 16
    d_in = (cfg["c_pos_emb"] + cfg["c_timestep_emb"]
            + cfg["c_SS_emb"] + cfg["c_fixedmask_emb"])

    key = jax.random.PRNGKey(0)
    k_w, k_b, k_ss, k_t, k_m, k_fm, k_s = jax.random.split(key, 7)

    params = dict(
        W=jax.random.normal(k_w, (d_in, cfg["c_s"]), jnp.float32) * 0.05,
        b=jax.random.normal(k_b, (cfg["c_s"],), jnp.float32) * 0.01,
        ss_table=jax.random.normal(k_ss, (4, cfg["c_SS_emb"]), jnp.float32),
    )

    timesteps = jax.random.uniform(k_t, (B, 1), jnp.float32)
    mask = (jax.random.uniform(k_m, (B, N)) > 0.2).astype(jnp.float32)
    fixed_mask = (jax.random.uniform(k_fm, (B, N)) > 0.5).astype(jnp.float32)
    ss = jax.random.randint(k_s, (B, N), 0, 4, jnp.int32)

    out = node_embedder_forward(timesteps, mask, fixed_mask, ss, params, cfg)
    out = jax.block_until_ready(out)

    ref = node_embedder_reference(timesteps, mask, fixed_mask, ss, params, cfg)
    assert out.shape == (B, N, cfg["c_s"])
    assert jnp.allclose(out, ref, atol=1e-4, rtol=1e-4), "mismatch vs reference"

    print("KERNEL_OK")
</pallas_src>

<mosaic_0001>
module attributes {stable_mosaic.version = 11 : i64} {
  func.func @_node_embedder_kernel(%arg0: i32, %arg1: i32, %arg2: memref<1x4x4xf32, #tpu.memory_space<vmem>>, %arg3: memref<1x4x4xf32, #tpu.memory_space<vmem>>, %arg4: memref<4x128xf32, #tpu.memory_space<vmem>>, %arg5: memref<1x2x128xf32, #tpu.memory_space<vmem>>, %arg6: memref<2x128xf32, #tpu.memory_space<vmem>>, %arg7: memref<4x128xf32, #tpu.memory_space<vmem>>, %arg8: memref<1x4x128xf32, #tpu.memory_space<vmem>>) attributes {dimension_semantics = [#tpu.dimension_semantics<parallel>, #tpu.dimension_semantics<parallel>], iteration_bounds = array<i64: 2, 1>, scalar_prefetch = 0 : i64, scratch_operands = 0 : i64, tpu.core_type = #tpu.core_type<tc>, window_params = [{transform_indices = @transform_0, window_bounds = array<i64: 1, 4, 4>}, {transform_indices = @transform_1, window_bounds = array<i64: 1, 4, 4>}, {transform_indices = @transform_2, window_bounds = array<i64: 4, 128>}, {transform_indices = @transform_3, window_bounds = array<i64: 1, 2, 128>}, {pipeline_mode = #tpu.pipeline_mode<synchronous>, transform_indices = @transform_4, window_bounds = array<i64: 2, 128>}, {pipeline_mode = #tpu.pipeline_mode<synchronous>, transform_indices = @transform_5, window_bounds = array<i64: 4, 128>}, {transform_indices = @transform_6, window_bounds = array<i64: 1, 4, 128>}]} {
    %c0 = arith.constant 0 : index
    %c0_0 = arith.constant 0 : index
    %0 = vector.load %arg7[%c0, %c0_0] : memref<4x128xf32, #tpu.memory_space<vmem>>, vector<4x128xf32>
    %c0_1 = arith.constant 0 : index
    %c0_2 = arith.constant 0 : index
    %c0_3 = arith.constant 0 : index
    %1 = vector.load %arg2[%c0_1, %c0_2, %c0_3] : memref<1x4x4xf32, #tpu.memory_space<vmem>>, vector<1x4x4xf32>
    %2 = vector.shape_cast %1 : vector<1x4x4xf32> to vector<4x4xf32>
    %cst = arith.constant dense<0.000000e+00> : vector<4x128xf32>
    %3 = tpu.matmul %2, %0, %cst {dimension_numbers = #tpu.dot_dimension_numbers<[1], [0], [0], [1], [0, 0, 1, 1], [], []>} : vector<4x4xf32>, vector<4x128xf32>, vector<4x128xf32> -> vector<4x128xf32>
    %c0_4 = arith.constant 0 : index
    %c0_5 = arith.constant 0 : index
    %c0_6 = arith.constant 0 : index
    %4 = vector.load %arg3[%c0_4, %c0_5, %c0_6] : memref<1x4x4xf32, #tpu.memory_space<vmem>>, vector<1x4x4xf32>
    %5 = vector.shape_cast %4 : vector<1x4x4xf32> to vector<4x4xf32>
    %cst_7 = arith.constant dense<0.000000e+00> : vector<4x128xf32>
    %6 = tpu.matmul %5, %0, %cst_7 {dimension_numbers = #tpu.dot_dimension_numbers<[1], [0], [0], [1], [0, 0, 1, 1], [], []>} : vector<4x4xf32>, vector<4x128xf32>, vector<4x128xf32> -> vector<4x128xf32>
    %c0_8 = arith.constant 0 : index
    %c0_9 = arith.constant 0 : index
    %c0_10 = arith.constant 0 : index
    %7 = vector.load %arg5[%c0_8, %c0_9, %c0_10] : memref<1x2x128xf32, #tpu.memory_space<vmem>>, vector<1x2x128xf32>
    %8 = vector.shape_cast %7 : vector<1x2x128xf32> to vector<2x128xf32>
    %9 = vector.extract_strided_slice %8 {offsets = [0, 0], sizes = [1, 128], strides = [1, 1]} : vector<2x128xf32> to vector<1x128xf32>
    %10 = vector.extract_strided_slice %8 {offsets = [1, 0], sizes = [1, 128], strides = [1, 1]} : vector<2x128xf32> to vector<1x128xf32>
    %c0_11 = arith.constant 0 : index
    %c0_12 = arith.constant 0 : index
    %11 = vector.load %arg6[%c0_11, %c0_12] : memref<2x128xf32, #tpu.memory_space<vmem>>, vector<2x128xf32>
    %12 = vector.extract_strided_slice %11 {offsets = [0, 0], sizes = [1, 128], strides = [1, 1]} : vector<2x128xf32> to vector<1x128xf32>
    %13 = vector.extract_strided_slice %11 {offsets = [1, 0], sizes = [1, 128], strides = [1, 1]} : vector<2x128xf32> to vector<1x128xf32>
    %c0_13 = arith.constant 0 : index
    %c0_14 = arith.constant 0 : index
    %14 = vector.load %arg4[%c0_13, %c0_14] : memref<4x128xf32, #tpu.memory_space<vmem>>, vector<4x128xf32>
    %15 = vector.broadcast %9 : vector<1x128xf32> to vector<4x128xf32>
    %16 = arith.addf %14, %15 : vector<4x128xf32>
    %17 = vector.broadcast %10 : vector<1x128xf32> to vector<4x128xf32>
    %18 = arith.mulf %6, %17 : vector<4x128xf32>
    %19 = arith.addf %16, %18 : vector<4x128xf32>
    %20 = arith.mulf %3, %19 : vector<4x128xf32>
    %21 = vector.broadcast %12 : vector<1x128xf32> to vector<4x128xf32>
    %22 = arith.mulf %6, %21 : vector<4x128xf32>
    %23 = arith.addf %20, %22 : vector<4x128xf32>
    %24 = vector.broadcast %13 : vector<1x128xf32> to vector<4x128xf32>
    %25 = arith.addf %23, %24 : vector<4x128xf32>
    %c0_15 = arith.constant 0 : index
    %c0_16 = arith.constant 0 : index
    %c0_17 = arith.constant 0 : index
    %26 = vector.load %arg8[%c0_15, %c0_16, %c0_17] : memref<1x4x128xf32, #tpu.memory_space<vmem>>, vector<1x4x128xf32>
    %27 = vector.shape_cast %26 : vector<1x4x128xf32> to vector<4x128xf32>
    %28 = vector.shape_cast %25 : vector<4x128xf32> to vector<1x4x128xf32>
    tpu.vector_store %arg8[%c0_15, %c0_16, %c0_17], %28 {strides = array<i32>} : memref<1x4x128xf32, #tpu.memory_space<vmem>>, vector<1x4x128xf32>,
    return
  }
  func.func @transform_0(%arg0: i32, %arg1: i32) -> (i32, i32, i32) {
    %c0_i32 = arith.constant 0 : i32
    %c0_i32_0 = arith.constant 0 : i32
    return %arg0, %arg1, %c0_i32 : i32, i32, i32
  }
  func.func @transform_1(%arg0: i32, %arg1: i32) -> (i32, i32, i32) {
    %c0_i32 = arith.constant 0 : i32
    %c0_i32_0 = arith.constant 0 : i32
    return %arg0, %arg1, %c0_i32 : i32, i32, i32
  }
  func.func @transform_2(%arg0: i32, %arg1: i32) -> (i32, i32) {
    %c0_i32 = arith.constant 0 : i32
    %c0_i32_0 = arith.constant 0 : i32
    return %arg1, %c0_i32 : i32, i32
  }
  func.func @transform_3(%arg0: i32, %arg1: i32) -> (i32, i32, i32) {
    %c0_i32 = arith.constant 0 : i32
    %c0_i32_0 = arith.constant 0 : i32
    %c0_i32_1 = arith.constant 0 : i32
    return %arg0, %c0_i32, %c0_i32_0 : i32, i32, i32
  }
  func.func @transform_4(%arg0: i32, %arg1: i32) -> (i32, i32) {
    %c0_i32 = arith.constant 0 : i32
    %c0_i32_0 = arith.constant 0 : i32
    %c0_i32_1 = arith.constant 0 : i32
    return %c0_i32, %c0_i32_0 : i32, i32
  }
  func.func @transform_5(%arg0: i32, %arg1: i32) -> (i32, i32) {
    %c0_i32 = arith.constant 0 : i32
    %c0_i32_0 = arith.constant 0 : i32
    %c0_i32_1 = arith.constant 0 : i32
    return %c0_i32, %c0_i32_0 : i32, i32
  }
  func.func @transform_6(%arg0: i32, %arg1: i32) -> (i32, i32, i32) {
    %c0_i32 = arith.constant 0 : i32
    %c0_i32_0 = arith.constant 0 : i32
    return %arg0, %arg1, %c0_i32 : i32, i32, i32
  }
}

</mosaic_0001>

<llo_original>
// kernel: tpu_custom_call.1
$region0: #{tpu_custom_call.1}
  #allocation0 [shape = 'u32[]', space=smem, size = 0x4, offset = 0x4, fixed_abs, tag = 'smem constant byte address 0x4 - core index']
  #allocation1 [shape = 'u32[72,128]{1,0:T(1,128)}', space=vmem, size = 0x9000, scoped, tag = 'internal scratch']
  %s0 = inlined_call_operand.hbm [shape: f32[2,4,4], index: 0, kind: input, shape index: {}]
  %s1 = inlined_call_operand.hbm [shape: f32[2,4,4], index: 1, kind: input, shape index: {}]
  %s2 = inlined_call_operand.hbm [shape: f32[4,128], index: 2, kind: input, shape index: {}]
  %s3 = inlined_call_operand.hbm [shape: f32[2,2,128], index: 3, kind: input, shape index: {}]
  %s4 = inlined_call_operand.hbm [shape: f32[2,128], index: 4, kind: input, shape index: {}]
  %s5 = inlined_call_operand.vmem [shape: f32[4,128], index: 5, kind: input, shape index: {}]
  %s6 = inlined_call_operand.hbm [shape: f32[2,4,128], index: 6, kind: output, shape index: {}]
  %s7 = sld [smem:[#allocation0]]
  $region77: #{tpu_custom_call.1} parent=0
    _
  %s9 = ssub.s32 1, %s7
  %s10 = scalar_select 0, %s9, %s7
  $region1: #{tpu_custom_call.1} parent=0
    #allocation2 [shape = 'u8[4096]{0}', space=vmem, size = 0x1000, scoped, tag = 'input window, operand 0']
    #allocation3 [shape = 's32[2]{0}', space=sflag, size = 0x8, scoped, tag = 'scoped memory for tpu_custom_call.1']
    #allocation4 [shape = 's32[2]{0}', space=sflag, size = 0x8, scoped, tag = 'scoped memory for tpu_custom_call.1']
    #allocation5 [shape = 'u8[4096]{0}', space=vmem, size = 0x1000, scoped, tag = 'input window, operand 1']
    #allocation6 [shape = 's32[2]{0}', space=sflag, size = 0x8, scoped, tag = 'scoped memory for tpu_custom_call.1']
    #allocation7 [shape = 'u8[2048]{0}', space=vmem, size = 0x800, scoped, tag = 'input window, operand 2, single buffered']
    #allocation8 [shape = 'u8[2048]{0}', space=vmem, size = 0x800, scoped, tag = 'input window, operand 3']
    #allocation9 [shape = 's32[2]{0}', space=sflag, size = 0x8, scoped, tag = 'scoped memory for tpu_custom_call.1']
    #allocation10 [shape = 'u8[1024]{0}', space=vmem, size = 0x400, scoped, tag = 'input window, operand 4, single buffered']
    #allocation11 [shape = 'u8[4096]{0}', space=vmem, size = 0x1000, scoped, tag = 'output window, operand 0']
    %11 = vsyncpa [#allocation3], 0
    %s12 = scalar_lea.sflag [#allocation3], 1
    %13 = vsyncpa %s12, 0
    %14 = vsyncpa [#allocation6], 0
    %s15 = scalar_lea.sflag [#allocation6], 1
    %16 = vsyncpa %s15, 0
    %17 = vsyncpa [#allocation9], 0
    %s18 = scalar_lea.sflag [#allocation9], 1
    %19 = vsyncpa %s18, 0
    %20 = vsyncpa [#allocation4], 0
    %s21 = scalar_lea.sflag [#allocation4], 1
    %22 = vsyncpa %s21, 0
    loop: start=0, step=1, limit=4
    $region2: #{tpu_custom_call.1} parent=1 // loop_pre_header
      _
    $region3: #{tpu_custom_call.1} parent=1 // loop_header
      %s24 = sphi 0, %s28
      %p25 = scmp.ge.s32.totalorder %s24, 4
      %s31 = sphi 0, %s43
      %s32 = sphi 0, %s39
      %s33 = sphi 0, %s31
      %s34 = sphi 0, %s32
      %s35 = sphi 0, %s33
      %s36 = sphi 0, %s34
      %s48 = sphi 0, %s50
      %s51 = sphi 0, %s48
      %s52 = sphi 0, %s51
      %s68 = sphi 0, %s52
      %s76 = sphi 0, %s78
      %s79 = sphi 0, %s76
      %s80 = sphi 0, %s79
      %s96 = sphi 0, %s80
      %s102 = sphi 0, %s104
      %s105 = sphi 0, %s102
      %s106 = sphi 0, %s105
      %s122 = sphi 0, %s106
      %s128 = sphi 0, %s130
      %s131 = sphi 0, %s128
      %s132 = sphi 0, %s131
      %s148 = sphi 0, %s132
      %s152 = sphi 0, %s152
      %s154 = sphi 0, %s152
      %s155 = sphi 0, %s154
      %s169 = sphi 0, %s155
      %s173 = sphi 0, %s173
      %s175 = sphi 0, %s173
      %s176 = sphi 0, %s175
      %s190 = sphi 0, %s176
      %s198 = sphi 0, %s200
      %s201 = sphi 0, %s198
      %s202 = sphi 0, %s201
      %s218 = sphi 0, %s202
    $region4: #{tpu_custom_call.1} parent=1 // loop_header_branch
      %27 = sbr.rel (%p25) target = $region8
    $region5: #{tpu_custom_call.1} parent=1 // loop_body
      %s29 = ssub.s32 %s24, 1
      %s30 = ssub.s32 %s24, 2
      %s37 = sadd.s32 1, %s32
      %p38 = scmp.ge.s32.totalorder %s37, 1
      %s39 = scalar_select %p38, 0, %s37
      %s40 = sadd.s32 1, %s31
      %s41 = scalar_select %p38, %s40, %s31
      %p42 = scmp.ge.s32.totalorder %s41, 2
      %s43 = scalar_select %p42, 0, %s41
      %s44 = ssub.s32 %s31, %s43
      %s45 = ssub.s32 %s32, %s39
      %s46 = sor.u32 %s44, %s45
      %p47 = scmp.eq.s32.totalorder %s46, 0
      %s49 = sadd.s32 %s48, 1
      %s50 = scalar_select %p47, %s48, %s49
      %p53 = pneg %p47
      %p54 = scmp.eq.s32.totalorder %s24, 1
      %p55 = por %p53, %p54
      %p56 = scmp.ne.s32.totalorder %s48, %s51
      %p57 = scmp.eq.s32.totalorder %s24, 0
      %p58 = por %p56, %p57
      %p59 = scmp.ne.s32.totalorder %s48, %s51
      %p60 = scmp.eq.s32.totalorder %s29, 1
      %p61 = por %p59, %p60
      %p62 = scmp.ne.s32.totalorder %s51, %s52
      %p63 = scmp.eq.s32.totalorder %s29, 0
      %p64 = por %p62, %p63
      %p65 = scmp.ne.s32.totalorder %s51, %s52
      %p66 = scmp.eq.s32.totalorder %s30, 1
      %p67 = por %p65, %p66
      %p69 = scmp.ne.s32.totalorder %s52, %s68
      %p70 = scmp.eq.s32.totalorder %s30, 0
      %p71 = por %p69, %p70
      %s72 = ssub.s32 %s31, %s43
      %s73 = ssub.s32 %s32, %s39
      %s74 = sor.u32 %s72, %s73
      %p75 = scmp.eq.s32.totalorder %s74, 0
      %s77 = sadd.s32 %s76, 1
      %s78 = scalar_select %p75, %s76, %s77
      %p81 = pneg %p75
      %p82 = scmp.eq.s32.totalorder %s24, 1
      %p83 = por %p81, %p82
      %p84 = scmp.ne.s32.totalorder %s76, %s79
      %p85 = scmp.eq.s32.totalorder %s24, 0
      %p86 = por %p84, %p85
      %p87 = scmp.ne.s32.totalorder %s76, %s79
      %p88 = scmp.eq.s32.totalorder %s29, 1
      %p89 = por %p87, %p88
      %p90 = scmp.ne.s32.totalorder %s79, %s80
      %p91 = scmp.eq.s32.totalorder %s29, 0
      %p92 = por %p90, %p91
      %p93 = scmp.ne.s32.totalorder %s79, %s80
      %p94 = scmp.eq.s32.totalorder %s30, 1
      %p95 = por %p93, %p94
      %p97 = scmp.ne.s32.totalorder %s80, %s96
      %p98 = scmp.eq.s32.totalorder %s30, 0
      %p99 = por %p97, %p98
      %s100 = ssub.s32 %s32, %s39
      %p101 = scmp.eq.s32.totalorder %s100, 0
      %s103 = sadd.s32 %s102, 1
      %s104 = scalar_select %p101, %s102, %s103
      %p107 = pneg %p101
      %p108 = scmp.eq.s32.totalorder %s24, 1
      %p109 = por %p107, %p108
      %p110 = scmp.ne.s32.totalorder %s102, %s105
      %p111 = scmp.eq.s32.totalorder %s24, 0
      %p112 = por %p110, %p111
      %p113 = scmp.ne.s32.totalorder %s102, %s105
      %p114 = scmp.eq.s32.totalorder %s29, 1
      %p115 = por %p113, %p114
      %p116 = scmp.ne.s32.totalorder %s105, %s106
      %p117 = scmp.eq.s32.totalorder %s29, 0
      %p118 = por %p116, %p117
      %p119 = scmp.ne.s32.totalorder %s105, %s106
      %p120 = scmp.eq.s32.totalorder %s30, 1
      %p121 = por %p119, %p120
      %p123 = scmp.ne.s32.totalorder %s106, %s122
      %p124 = scmp.eq.s32.totalorder %s30, 0
      %p125 = por %p123, %p124
      %s126 = ssub.s32 %s31, %s43
      %p127 = scmp.eq.s32.totalorder %s126, 0
      %s129 = sadd.s32 %s128, 1
      %s130 = scalar_select %p127, %s128, %s129
      %p133 = pneg %p127
      %p134 = scmp.eq.s32.totalorder %s24, 1
      %p135 = por %p133, %p134
      %p136 = scmp.ne.s32.totalorder %s128, %s131
      %p137 = scmp.eq.s32.totalorder %s24, 0
      %p138 = por %p136, %p137
      %p139 = scmp.ne.s32.totalorder %s128, %s131
      %p140 = scmp.eq.s32.totalorder %s29, 1
      %p141 = por %p139, %p140
      %p142 = scmp.ne.s32.totalorder %s131, %s132
      %p143 = scmp.eq.s32.totalorder %s29, 0
      %p144 = por %p142, %p143
      %p145 = scmp.ne.s32.totalorder %s131, %s132
      %p146 = scmp.eq.s32.totalorder %s30, 1
      %p147 = por %p145, %p146
      %p149 = scmp.ne.s32.totalorder %s132, %s148
      %p150 = scmp.eq.s32.totalorder %s30, 0
      %p151 = por %p149, %p150
      %s153 = sadd.s32 %s152, 1
      %p156 = scmp.eq.s32.totalorder %s24, 1
      %p157 = scmp.ne.s32.totalorder %s152, %s154
      %p158 = scmp.eq.s32.totalorder %s24, 0
      %p159 = por %p157, %p158
      %p160 = scmp.ne.s32.totalorder %s152, %s154
      %p161 = scmp.eq.s32.totalorder %s29, 1
      %p162 = por %p160, %p161
      %p163 = scmp.ne.s32.totalorder %s154, %s155
      %p164 = scmp.eq.s32.totalorder %s29, 0
      %p165 = por %p163, %p164
      %p166 = scmp.ne.s32.totalorder %s154, %s155
      %p167 = scmp.eq.s32.totalorder %s30, 1
      %p168 = por %p166, %p167
      %p170 = scmp.ne.s32.totalorder %s155, %s169
      %p171 = scmp.eq.s32.totalorder %s30, 0
      %p172 = por %p170, %p171
      %s174 = sadd.s32 %s173, 1
      %p177 = scmp.eq.s32.totalorder %s24, 1
      %p178 = scmp.ne.s32.totalorder %s173, %s175
      %p179 = scmp.eq.s32.totalorder %s24, 0
      %p180 = por %p178, %p179
      %p181 = scmp.ne.s32.totalorder %s173, %s175
      %p182 = scmp.eq.s32.totalorder %s29, 1
      %p183 = por %p181, %p182
      %p184 = scmp.ne.s32.totalorder %s175, %s176
      %p185 = scmp.eq.s32.totalorder %s29, 0
      %p186 = por %p184, %p185
      %p187 = scmp.ne.s32.totalorder %s175, %s176
      %p188 = scmp.eq.s32.totalorder %s30, 1
      %p189 = por %p187, %p188
      %p191 = scmp.ne.s32.totalorder %s176, %s190
      %p192 = scmp.eq.s32.totalorder %s30, 0
      %p193 = por %p191, %p192
      %s194 = ssub.s32 %s31, %s43
      %s195 = ssub.s32 %s32, %s39
      %s196 = sor.u32 %s194, %s195
      %p197 = scmp.eq.s32.totalorder %s196, 0
      %s199 = sadd.s32 %s198, 1
      %s200 = scalar_select %p197, %s198, %s199
      %p203 = pneg %p197
      %p204 = scmp.eq.s32.totalorder %s24, 1
      %p205 = por %p203, %p204
      %p206 = scmp.ne.s32.totalorder %s198, %s201
      %p207 = scmp.eq.s32.totalorder %s24, 0
      %p208 = por %p206, %p207
      %p209 = scmp.ne.s32.totalorder %s198, %s201
      %p210 = scmp.eq.s32.totalorder %s29, 1
      %p211 = por %p209, %p210
      %p212 = scmp.ne.s32.totalorder %s201, %s202
      %p213 = scmp.eq.s32.totalorder %s29, 0
      %p214 = por %p212, %p213
      %p215 = scmp.ne.s32.totalorder %s201, %s202
      %p216 = scmp.eq.s32.totalorder %s30, 1
      %p217 = por %p215, %p216
      %p219 = scmp.ne.s32.totalorder %s202, %s218
      %p220 = scmp.eq.s32.totalorder %s30, 0
      %p221 = por %p219, %p220
      %p222 = scmp.le.s32.totalorder 1, %s24
      %p223 = scmp.lt.s32.totalorder %s24, 3
      %p224 = pnand %p222, %p223
      %p225 = pneg %p224
      // Predicated region
      $region9: #{tpu_custom_call.1} parent=5 // pred_check
        _
      $region10: #{tpu_custom_call.1} parent=5 // pred_check_branch
        %227 = sbr.rel (%p224) target = $region12
      $region11: #{tpu_custom_call.1} parent=5 // pred_region
        %s228 = ssub.s32 %s24, 1
        // Predicated region
        $region13: #{tpu_custom_call.1} parent=11 // pred_check
          %p229 = pneg %p118
        $region14: #{tpu_custom_call.1} parent=11 // pred_check_branch
          %231 = sbr.rel (%p229) target = $region16
        $region15: #{tpu_custom_call.1} parent=11 // pred_region
          %233 = vsyncadd [#allocation6], 0
          %s234 = smul.addr %s34, 4
          %s235 = scalar_lea.hbm %s2, %s234
          %s237 = sshll.u32 %s235, 4
          %s238 = int_to_ptr.hbm [resolvable:$true] %s237
          %s239 = sshll.u32 [#allocation7], 4
          %s240 = int_to_ptr.vmem [resolvable:$true] %s239
          %242 = dma.hbm_to_vmem [thread:$0]  %s238, 64, %s240, [#allocation6]
        $region16: #{tpu_custom_call.1} parent=11 // pred_fallthru
          _
        // Predicated region
        $region17: #{tpu_custom_call.1} parent=11 // pred_check
          %p243 = pneg %p165
        $region18: #{tpu_custom_call.1} parent=11 // pred_check_branch
          %245 = sbr.rel (%p243) target = $region20
        $region19: #{tpu_custom_call.1} parent=11 // pred_region
          %247 = vsyncadd [#allocation9], 0
          %s249 = sshll.u32 %s4, 4
          %s250 = int_to_ptr.hbm [resolvable:$true] %s249
          %s251 = sshll.u32 [#allocation10], 4
          %s252 = int_to_ptr.vmem [resolvable:$true] %s251
          %254 = dma.hbm_to_vmem [thread:$0]  %s250, 32, %s252, [#allocation9]
        $region20: #{tpu_custom_call.1} parent=11 // pred_fallthru
          _
        // Predicated region
        $region21: #{tpu_custom_call.1} parent=11 // pred_check
          %p255 = pneg %p186
        $region22: #{tpu_custom_call.1} parent=11 // pred_check_branch
          %257 = sbr.rel (%p255) target = $region24
        $region23: #{tpu_custom_call.1} parent=11 // pred_region
          _
        $region24: #{tpu_custom_call.1} parent=11 // pred_fallthru
          _
      $region12: #{tpu_custom_call.1} parent=5 // pred_fallthru
        _
      %p258 = scmp.lt.s32.totalorder %s24, 2
      // Predicated region
      $region25: #{tpu_custom_call.1} parent=5 // pred_check
        %p259 = pneg %p258
      $region26: #{tpu_custom_call.1} parent=5 // pred_check_branch
        %261 = sbr.rel (%p259) target = $region28
      $region27: #{tpu_custom_call.1} parent=5 // pred_region
        // Predicated region
        $region29: #{tpu_custom_call.1} parent=27 // pred_check
          %p262 = pneg %p58
        $region30: #{tpu_custom_call.1} parent=27 // pred_check_branch
          %264 = sbr.rel (%p262) target = $region32
        $region31: #{tpu_custom_call.1} parent=27 // pred_region
          %s265 = sand.u32 %s48, 1
          %s266 = scalar_lea.sflag [#allocation3], %s265
          %s267 = sand.u32 %s48, 1
          %s268 = smul.addr %s267, 4
          %s269 = scalar_lea.vmem [#allocation2], %s268
          %271 = vsyncadd %s266, 0
          %s272 = sadd.s32 %s32, %s31
          %s273 = smul.addr %s272, 4
          %s274 = scalar_lea.hbm %s0, %s273
          %s276 = sshll.u32 %s274, 4
          %s277 = int_to_ptr.hbm [resolvable:$true] %s276
          %s278 = sshll.u32 %s269, 4
          %s279 = int_to_ptr.vmem [resolvable:$true] %s278
          %281 = dma.hbm_to_vmem [thread:$0]  %s277, 64, %s279, %s266
        $region32: #{tpu_custom_call.1} parent=27 // pred_fallthru
          _
        // Predicated region
        $region33: #{tpu_custom_call.1} parent=27 // pred_check
          %p282 = pneg %p86
        $region34: #{tpu_custom_call.1} parent=27 // pred_check_branch
          %284 = sbr.rel (%p282) target = $region36
        $region35: #{tpu_custom_call.1} parent=27 // pred_region
          %s285 = sand.u32 %s24, 1
          %s286 = scalar_lea.sflag [#allocation6], %s285
          %s287 = sand.u32 %s76, 1
          %s288 = smul.addr %s287, 4
          %s289 = scalar_lea.vmem [#allocation5], %s288
          %291 = vsyncadd %s286, 0
          %s292 = sadd.s32 %s32, %s31
          %s293 = smul.addr %s292, 4
          %s294 = scalar_lea.hbm %s1, %s293
          %s296 = sshll.u32 %s294, 4
          %s297 = int_to_ptr.hbm [resolvable:$true] %s296
          %s298 = sshll.u32 %s289, 4
          %s299 = int_to_ptr.vmem [resolvable:$true] %s298
          %301 = dma.hbm_to_vmem [thread:$0]  %s297, 64, %s299, %s286
        $region36: #{tpu_custom_call.1} parent=27 // pred_fallthru
          _
        // Predicated region
        $region37: #{tpu_custom_call.1} parent=27 // pred_check
          %p302 = pneg %p138
        $region38: #{tpu_custom_call.1} parent=27 // pred_check_branch
          %304 = sbr.rel (%p302) target = $region40
        $region39: #{tpu_custom_call.1} parent=27 // pred_region
          %s305 = sand.u32 %s24, 1
          %s306 = scalar_lea.sflag [#allocation9], %s305
          %s307 = sand.u32 %s128, 1
          %s308 = smul.addr %s307, 2
          %s309 = scalar_lea.vmem [#allocation8], %s308
          %311 = vsyncadd %s306, 0
          %s312 = smul.addr %s31, 2
          %s313 = scalar_lea.hbm %s3, %s312
          %s315 = sshll.u32 %s313, 4
          %s316 = int_to_ptr.hbm [resolvable:$true] %s315
          %s317 = sshll.u32 %s309, 4
          %s318 = int_to_ptr.vmem [resolvable:$true] %s317
          %320 = dma.hbm_to_vmem [thread:$0]  %s316, 32, %s318, %s306
        $region40: #{tpu_custom_call.1} parent=27 // pred_fallthru
          _
      $region28: #{tpu_custom_call.1} parent=5 // pred_fallthru
        _
      %p321 = scmp.le.s32.totalorder 1, %s24
      %p322 = scmp.lt.s32.totalorder %s24, 3
      %p323 = pnand %p321, %p322
      %p324 = pneg %p323
      // Predicated region
      $region41: #{tpu_custom_call.1} parent=5 // pred_check
        _
      $region42: #{tpu_custom_call.1} parent=5 // pred_check_branch
        %326 = sbr.rel (%p323) target = $region44
      $region43: #{tpu_custom_call.1} parent=5 // pred_region
        %s327 = ssub.s32 %s24, 1
        %s328 = sand.u32 %s51, 1
        %s329 = scalar_lea.sflag [#allocation3], %s328
        %s330 = sand.u32 %s51, 1
        %s331 = smul.addr %s330, 4
        %s332 = scalar_lea.vmem [#allocation2], %s331
        // Predicated region
        $region45: #{tpu_custom_call.1} parent=43 // pred_check
          %p333 = pneg %p64
        $region46: #{tpu_custom_call.1} parent=43 // pred_check_branch
          %335 = sbr.rel (%p333) target = $region48
        $region47: #{tpu_custom_call.1} parent=43 // pred_region
          %337 = dma.done %s329, 64
        $region48: #{tpu_custom_call.1} parent=43 // pred_fallthru
          _
        %s338 = sand.u32 %s29, 1
        %s339 = scalar_lea.sflag [#allocation6], %s338
        %s340 = sand.u32 %s79, 1
        %s341 = smul.addr %s340, 4
        %s342 = scalar_lea.vmem [#allocation5], %s341
        // Predicated region
        $region49: #{tpu_custom_call.1} parent=43 // pred_check
          %p343 = pneg %p92
        $region50: #{tpu_custom_call.1} parent=43 // pred_check_branch
          %345 = sbr.rel (%p343) target = $region52
        $region51: #{tpu_custom_call.1} parent=43 // pred_region
          %347 = dma.done %s339, 64
        $region52: #{tpu_custom_call.1} parent=43 // pred_fallthru
          _
        // Predicated region
        $region53: #{tpu_custom_call.1} parent=43 // pred_check
          %p348 = pneg %p118
        $region54: #{tpu_custom_call.1} parent=43 // pred_check_branch
          %350 = sbr.rel (%p348) target = $region56
        $region55: #{tpu_custom_call.1} parent=43 // pred_region
          %352 = dma.done [#allocation6], 64
        $region56: #{tpu_custom_call.1} parent=43 // pred_fallthru
          _
        %s353 = sand.u32 %s29, 1
        %s354 = scalar_lea.sflag [#allocation9], %s353
        %s355 = sand.u32 %s131, 1
        %s356 = smul.addr %s355, 2
        %s357 = scalar_lea.vmem [#allocation8], %s356
        // Predicated region
        $region57: #{tpu_custom_call.1} parent=43 // pred_check
          %p358 = pneg %p144
        $region58: #{tpu_custom_call.1} parent=43 // pred_check_branch
          %360 = sbr.rel (%p358) target = $region60
        $region59: #{tpu_custom_call.1} parent=43 // pred_region
          %362 = dma.done %s354, 32
        $region60: #{tpu_custom_call.1} parent=43 // pred_fallthru
          _
        // Predicated region
        $region61: #{tpu_custom_call.1} parent=43 // pred_check
          %p363 = pneg %p165
        $region62: #{tpu_custom_call.1} parent=43 // pred_check_branch
          %365 = sbr.rel (%p363) target = $region64
        $region63: #{tpu_custom_call.1} parent=43 // pred_region
          %367 = dma.done [#allocation9], 32
        $region64: #{tpu_custom_call.1} parent=43 // pred_fallthru
          _
        %s368 = sand.u32 %s51, 1
        %s369 = scalar_lea.sflag [#allocation3], %s368
        %s370 = sand.u32 %s51, 1
        %s371 = smul.addr %s370, 4
        %s372 = scalar_lea.vmem [#allocation2], %s371
        %p373 = pneg %p64
        %p374 = pneg %p61
        %s375 = sand.u32 %s29, 1
        %s376 = scalar_lea.sflag [#allocation6], %s375
        %s377 = sand.u32 %s79, 1
        %s378 = smul.addr %s377, 4
        %s379 = scalar_lea.vmem [#allocation5], %s378
        %p380 = pneg %p92
        %p381 = pneg %p89
        %p382 = pneg %p118
        %p383 = pneg %p115
        %s384 = sand.u32 %s29, 1
        %s385 = scalar_lea.sflag [#allocation9], %s384
        %s386 = sand.u32 %s131, 1
        %s387 = smul.addr %s386, 2
        %s388 = scalar_lea.vmem [#allocation8], %s387
        %p389 = pneg %p144
        %p390 = pneg %p141
        %p391 = pneg %p165
        %p392 = pneg %p162
        %p393 = pneg %p186
        %p394 = pneg %p183
        %p395 = pneg %p214
        %p396 = pneg %p211
        %s397 = sand.u32 %s201, 1
        %s398 = scalar_lea.sflag [#allocation4], %s397
        %s399 = sand.u32 %s201, 1
        %s400 = smul.addr %s399, 4
        %s401 = scalar_lea.vmem [#allocation11], %s400
        %v402 = vld [vmem:[%s5] sm:$0xf]
        %v403 = vld [vmem:[%s332] sm:$0xf]
        %vm404 = vcmask 31744
        %v406 = vsel %vm404, %v403, 0
        %vm408 = vcmask 1043456
        %v410 = vsel %vm408, %v402, 0
        %412 = vmatpush.msra.mxu0 0.0
        %413 = vmatpush.msra.mxu0 0.0
        %414 = vmatpush.msra.mxu0 0.0
        %415 = vmatpush.msra.mxu0 0.0
        %416 = vmatpush.msra.mxu0 0.0
        %417 = vmatpush.msra.mxu0 0.0
        %418 = vmatpush.msra.mxu0 0.0
        %419 = vmatpush.msra.mxu0 0.0
        %420 = vmatpush.msra.mxu0 0.0
        %421 = vmatpush.msra.mxu0 0.0
        %422 = vmatpush.msra.mxu0 0.0
        %423 = vmatpush.msra.mxu0 0.0
        %424 = vmatpush.msra.mxu0 0.0
        %425 = vmatpush.msra.mxu0 0.0
        %426 = vmatpush.msra.mxu0 0.0
        %427 = vmatpush.msra.mxu0 %v410
        %428 = vmatmul.f32.gmra.mxu0 %v406
        %v429 = vpop.f32.mrf.mxu0
        %v430 = vadd.f32 0.0, %v429
        %431 = vdwg.mxu0
        %v432 = vld [vmem:[%s342] sm:$0xf]
        %v434 = vsel %vm404, %v432, 0
        %436 = vmatpush.msra.mxu0 0.0
        %437 = vmatpush.msra.mxu0 0.0
        %438 = vmatpush.msra.mxu0 0.0
        %439 = vmatpush.msra.mxu0 0.0
        %440 = vmatpush.msra.mxu0 0.0
        %441 = vmatpush.msra.mxu0 0.0
        %442 = vmatpush.msra.mxu0 0.0
        %443 = vmatpush.msra.mxu0 0.0
        %444 = vmatpush.msra.mxu0 0.0
        %445 = vmatpush.msra.mxu0 0.0
        %446 = vmatpush.msra.mxu0 0.0
        %447 = vmatpush.msra.mxu0 0.0
        %448 = vmatpush.msra.mxu0 0.0
        %449 = vmatpush.msra.mxu0 0.0
        %450 = vmatpush.msra.mxu0 0.0
        %451 = vmatpush.msra.mxu0 %v410
        %452 = vmatmul.f32.gmra.mxu0 %v434
        %v453 = vpop.f32.mrf.mxu0
        %v454 = vadd.f32 0.0, %v453
        %455 = vdwg.mxu0
        %v456 = vld [vmem:[%s357] sm:$0x3]
        %v457 = vld [vmem:[#allocation10] sm:$0x3]
        %v458 = vld [vmem:[#allocation7] sm:$0xf]
        %v459 = vperm.slane %v456, 0
        %v460 = vadd.f32 %v458, %v459
        %v461 = vperm.slane %v456, 1
        %v462 = vmul.f32 %v454, %v461
        %v463 = vadd.f32 %v460, %v462
        %v464 = vmul.f32 %v430, %v463
        %v465 = vperm.slane %v457, 0
        %v466 = vmul.f32 %v454, %v465
        %v467 = vadd.f32 %v464, %v466
        %v468 = vperm.slane %v457, 1
        %v469 = vadd.f32 %v467, %v468
        %470 = vst [vmem:[%s401] sm:$0xf] %v469
        %s471 = sand.u32 %s201, 1
        %s472 = scalar_lea.sflag [#allocation4], %s471
        %s473 = sand.u32 %s201, 1
        %s474 = smul.addr %s473, 4
        %s475 = scalar_lea.vmem [#allocation11], %s474
        // Predicated region
        $region65: #{tpu_custom_call.1} parent=43 // pred_check
          %p476 = pneg %p211
        $region66: #{tpu_custom_call.1} parent=43 // pred_check_branch
          %478 = sbr.rel (%p476) target = $region68
        $region67: #{tpu_custom_call.1} parent=43 // pred_region
          %480 = vsyncadd %s472, 0
          %s481 = sadd.s32 %s34, %s33
          %s482 = smul.addr %s481, 4
          %s483 = scalar_lea.hbm %s6, %s482
          %s485 = sshll.u32 %s475, 4
          %s486 = int_to_ptr.vmem [resolvable:$true] %s485
          %s487 = sshll.u32 %s483, 4
          %s488 = int_to_ptr.hbm [resolvable:$true] %s487
          %490 = dma.vmem_to_hbm [thread:$0]  %s486, 64, %s488, %s472
        $region68: #{tpu_custom_call.1} parent=43 // pred_fallthru
          _
      $region44: #{tpu_custom_call.1} parent=5 // pred_fallthru
        _
      %p491 = scmp.le.s32.totalorder 2, %s24
      // Predicated region
      $region69: #{tpu_custom_call.1} parent=5 // pred_check
        %p492 = pneg %p491
      $region70: #{tpu_custom_call.1} parent=5 // pred_check_branch
        %494 = sbr.rel (%p492) target = $region72
      $region71: #{tpu_custom_call.1} parent=5 // pred_region
        %s495 = ssub.s32 %s24, 2
        // Predicated region
        $region73: #{tpu_custom_call.1} parent=71 // pred_check
          %p496 = pneg %p217
        $region74: #{tpu_custom_call.1} parent=71 // pred_check_branch
          %498 = sbr.rel (%p496) target = $region76
        $region75: #{tpu_custom_call.1} parent=71 // pred_region
          %s499 = sand.u32 %s202, 1
          %s500 = scalar_lea.sflag [#allocation4], %s499
          %s501 = sand.u32 %s202, 1
          %s502 = smul.addr %s501, 4
          %s503 = scalar_lea.vmem [#allocation11], %s502
          %505 = dma.done %s500, 64
        $region76: #{tpu_custom_call.1} parent=71 // pred_fallthru
          _
      $region72: #{tpu_custom_call.1} parent=5 // pred_fallthru
        _
    $region6: #{tpu_custom_call.1} parent=1 // loop_footer
      %s28 = sadd.s32 1, %s24
    $region7: #{tpu_custom_call.1} parent=1 // loop_footer_branch
      %23 = sbr.rel target = $region3
    $region8: #{tpu_custom_call.1} parent=1 // loop_exit
      _
    %506 = vsyncpa [#allocation3], 1
    %s507 = scalar_lea.sflag [#allocation3], 1
    %508 = vsyncpa %s507, 1
    %509 = vsyncpa [#allocation6], 1
    %s510 = scalar_lea.sflag [#allocation6], 1
    %511 = vsyncpa %s510, 1
    %512 = vsyncpa [#allocation9], 1
    %s513 = scalar_lea.sflag [#allocation9], 1
    %514 = vsyncpa %s513, 1
    %515 = vsyncpa [#allocation4], 1
    %s516 = scalar_lea.sflag [#allocation4], 1
    %517 = vsyncpa %s516, 1

</llo_original>
